<compile_context>
chip_gen: v6e
topology: v6e:2x2x1
jax: 0.10.0
libtpu: 0.0.40
codegen_flags: <defaults>
</compile_context>

<pallas_src>
import functools

import jax
import jax.numpy as jnp
from jax.experimental import pallas as pl
from jax.experimental.pallas import tpu as pltpu


def gated_attention_kernel(x_ref, w_emb_ref, w_vu_ref, small_ref, scal_ref,
                           yprob_ref, a_ref, *, n_valid):
    x = x_ref[...]                                   # (Np, D)  bf16
    w_emb = w_emb_ref[...]                           # (D, M)   bf16
    w_vu = w_vu_ref[...]                             # (M, 2L)  bf16

    Np = x.shape[0]
    M = w_emb.shape[1]
    L2 = w_vu.shape[1]
    L = L2 // 2

    # Small f32 params, packed into one lane-padded array (all offsets are
    # static multiples of 128).
    b_emb = small_ref[:, pl.ds(0, M)]                # (1, M)
    b_vu = small_ref[:, pl.ds(M, L2)]                # (1, 2L)
    w_w = small_ref[:, pl.ds(M + L2, L)]             # (1, L)
    w_c = small_ref[:, pl.ds(M + L2 + L, M)]         # (1, M)
    b_w = scal_ref[0]                                # scalar (SMEM)
    b_c = scal_ref[1]                                # scalar (SMEM)

    # embedding_proj: Linear(D, M) + ReLU   (bf16 MXU inputs, f32 accumulation)
    h = jnp.dot(x, w_emb, preferred_element_type=jnp.float32) + b_emb
    h = jnp.maximum(h, 0.0)                          # (Np, M) f32
    h_bf16 = h.astype(jnp.bfloat16)                  # reused by BOTH MXU dots below

    # fused gated-attention branches: one (Np, M) @ (M, 2L) bf16 matmul, split in lanes.
    g = jnp.dot(h_bf16, w_vu, preferred_element_type=jnp.float32) + b_vu   # (Np, 2L) f32
    av = jnp.tanh(g[:, :L])                          # (Np, L) f32
    au = jax.nn.sigmoid(g[:, L:])                    # (Np, L) f32
    gate = (av * au).astype(jnp.bfloat16)            # (Np, L) bf16

    # attention_w: logits produced lane-major as (1, Np) on the MXU:
    # (1, L) contracted with (Np, L) over L  ==  w_w @ gate^T.
    logits = jax.lax.dot_general(
        w_w.astype(jnp.bfloat16), gate, (((1,), (1,)), ((), ())),
        preferred_element_type=jnp.float32) + b_w    # (1, Np) f32

    # Mask padded instances so they get zero attention weight.
    lane = jax.lax.broadcasted_iota(jnp.int32, (1, Np), 1)
    logits = jnp.where(lane < n_valid, logits, jnp.float32(-1e30))

    # softmax over instances (lane reductions; matches softmax(A.T, dim=1)).
    # Exact normalization: sum(A) == 1 to f32 precision.
    m = jnp.max(logits, axis=-1, keepdims=True)
    e = jnp.exp(logits - m)
    s = jnp.sum(e, axis=-1, keepdims=True)
    attn = e / s                                     # (1, Np) f32, padded lanes exactly 0

    # Z = A @ H on the MXU (bf16 inputs, f32 accumulation) -> (1, M)
    z = jnp.dot(attn.astype(jnp.bfloat16), h_bf16,
                preferred_element_type=jnp.float32)

    # classifier: Linear(M*K, 1) + sigmoid, kept in f32 (feeds the 0.5 threshold).
    logit_c = jnp.sum(z * w_c, axis=-1, keepdims=True) + b_c   # (1, 1)
    yprob_ref[...] = jax.nn.sigmoid(logit_c)
    a_ref[...] = attn                                # lane-dense (1, Np) store


def gated_attention_forward(x, packed):
    """x: (1, N, D) float32, packed: dict from pack_params().

    Returns (Y_prob (1,1), Y_hat (1,1), A (1,N)) — same as the torch module
    with attention_branches == 1.
    """
    x2 = x[0]
    N, D = x2.shape
    Np = ((N + 127) // 128) * 128                    # lane-dense instance count
    x_pad = jnp.zeros((Np, D), jnp.bfloat16).at[:N, :].set(x2.astype(jnp.bfloat16))

    vmem = pl.BlockSpec(memory_space=pltpu.MemorySpace.VMEM)
    smem = pl.BlockSpec(memory_space=pltpu.MemorySpace.SMEM)

    yprob, attn_p = pl.pallas_call(
        functools.partial(gated_attention_kernel, n_valid=N),
        in_specs=[vmem, vmem, vmem, vmem, smem],
        out_specs=(vmem, vmem),
        out_shape=(jax.ShapeDtypeStruct((1, 1), jnp.float32),
                   jax.ShapeDtypeStruct((1, Np), jnp.float32)),
        compiler_params=pltpu.CompilerParams(
            # Actual footprint is well under 1 MiB; don't reserve 32 MiB.
            vmem_limit_bytes=4 * 1024 * 1024),
    )(x_pad, packed["w_emb"], packed["w_vu"], packed["small"], packed["scal"])

    attn = attn_p[:, :N]
    yhat = (yprob >= 0.5).astype(jnp.float32)        # threshold in the wrapper
    return yprob, yhat, attn


def init_params(key, input_dim, M=256, L=128):
    """PyTorch-style init U(-1/sqrt(fan_in), 1/sqrt(fan_in)); math layout (in, out)."""
    def linear(k, fan_in, fan_out, row_vec=False):
        kw, kb = jax.random.split(k)
        bound = 1.0 / float(jnp.sqrt(fan_in))
        if row_vec:   # fan_out == 1: store as a (1, fan_in) row vector
            w = jax.random.uniform(kw, (1, fan_in), jnp.float32, -bound, bound)
        else:         # store (fan_in, fan_out) so we compute x @ W
            w = jax.random.uniform(kw, (fan_in, fan_out), jnp.float32, -bound, bound)
        b = jax.random.uniform(kb, (1, fan_out), jnp.float32, -bound, bound)
        return w, b

    k = jax.random.split(key, 5)
    w_emb, b_emb = linear(k[0], input_dim, M)
    w_v, b_v = linear(k[1], M, L)
    w_u, b_u = linear(k[2], M, L)
    w_w, b_w = linear(k[3], L, 1, row_vec=True)
    w_c, b_c = linear(k[4], M, 1, row_vec=True)   # classifier: Linear(M*K, 1), K=1
    return dict(w_emb=w_emb, b_emb=b_emb, w_v=w_v, b_v=b_v,
                w_u=w_u, b_u=b_u, w_w=w_w, b_w=b_w, w_c=w_c, b_c=b_c)


def pack_params(p):
    """Fuse V/U weights into (M, 2L) bf16, cast big matmul weights to bf16 and
    pack all small f32 params into one lane-padded array + one SMEM scalar pair."""
    M = p["w_emb"].shape[1]
    L = p["w_v"].shape[1]
    small = jnp.concatenate(
        [p["b_emb"], p["b_v"], p["b_u"], p["w_w"], p["w_c"]], axis=1)   # (1, 2M+3L)
    pad = (-small.shape[1]) % 128
    if pad:
        small = jnp.pad(small, ((0, 0), (0, pad)))
    scal = jnp.concatenate([p["b_w"].reshape(-1), p["b_c"].reshape(-1)])  # (2,)
    return dict(
        w_emb=p["w_emb"].astype(jnp.bfloat16),
        w_vu=jnp.concatenate([p["w_v"], p["w_u"]], axis=1).astype(jnp.bfloat16),
        small=small.astype(jnp.float32),
        scal=scal.astype(jnp.float32),
        M=M, L=L,   # unused by the kernel (shapes are static) but handy metadata
    )


def reference_forward(x, p):
    """Pure-JAX f32 reference mirroring the torch forward exactly."""
    x2 = x[0]
    h = jnp.maximum(x2 @ p["w_emb"] + p["b_emb"], 0.0)
    av = jnp.tanh(h @ p["w_v"] + p["b_v"])
    au = jax.nn.sigmoid(h @ p["w_u"] + p["b_u"])
    a_logits = (av * au) @ p["w_w"].T + p["b_w"]          # (N, 1)
    a = jax.nn.softmax(a_logits.T, axis=1)                # (1, N)
    z = a @ h                                             # (1, M)
    yprob = jax.nn.sigmoid(z @ p["w_c"].T + p["b_c"])     # (1, 1)
    yhat = (yprob >= 0.5).astype(jnp.float32)
    return yprob, yhat, a


if __name__ == "__main__":
    # Small shapes: bag of N=8 instances, input_dim=64, M=256, L=128, K=1.
    N, D, M, L = 8, 64, 256, 128
    key = jax.random.PRNGKey(0)
    kx, kp = jax.random.split(key)
    x = jax.random.normal(kx, (1, N, D), dtype=jnp.float32)
    params = init_params(kp, D, M=M, L=L)
    packed = pack_params(params)
    # M/L metadata not needed by the jitted forward; drop to keep the pytree arrays-only.
    packed = {k: v for k, v in packed.items() if k in ("w_emb", "w_vu", "small", "scal")}

    fwd = jax.jit(gated_attention_forward)
    y_prob, y_hat, A = fwd(x, packed)
    jax.block_until_ready((y_prob, y_hat, A))

    y_prob_r, y_hat_r, A_r = reference_forward(x, params)

    assert y_prob.shape == (1, 1) and y_hat.shape == (1, 1) and A.shape == (1, N)
    # bf16 matmul inputs (f32 accumulation) vs pure-f32 reference: a few-per-mille
    # deviation is expected, well within 2e-2.
    assert jnp.allclose(y_prob, y_prob_r, atol=2e-2, rtol=2e-2)
    assert jnp.allclose(A, A_r, atol=2e-2, rtol=2e-2)
    # Exact softmax normalization in the kernel -> sum(A) == 1 to f32 precision.
    assert jnp.allclose(jnp.sum(A), 1.0, atol=1e-3)
    # Hard 0.5 threshold is computed in the wrapper from the kernel's own Y_prob,
    # so it is self-consistent by construction.
    assert jnp.array_equal(y_hat, (y_prob >= 0.5).astype(jnp.float32))

    print("KERNEL_OK")
</pallas_src>

<mosaic_0001>
module attributes {stable_mosaic.version = 11 : i64} {
  func.func @gated_attention_kernel(%arg0: memref<128x64xbf16, #tpu.memory_space<vmem>>, %arg1: memref<64x256xbf16, #tpu.memory_space<vmem>>, %arg2: memref<256x256xbf16, #tpu.memory_space<vmem>>, %arg3: memref<1x896xf32, #tpu.memory_space<vmem>>, %arg4: memref<2xf32, #tpu.memory_space<smem>>, %arg5: memref<1x1xf32, #tpu.memory_space<vmem>>, %arg6: memref<1x128xf32, #tpu.memory_space<vmem>>) attributes {dimension_semantics = [], scalar_prefetch = 0 : i64, scratch_operands = 0 : i64, tpu.core_type = #tpu.core_type<tc>} {
    %c0 = arith.constant 0 : index
    %c0_0 = arith.constant 0 : index
    %0 = vector.load %arg0[%c0, %c0_0] : memref<128x64xbf16, #tpu.memory_space<vmem>>, vector<128x64xbf16>
    %c0_1 = arith.constant 0 : index
    %c0_2 = arith.constant 0 : index
    %1 = vector.load %arg1[%c0_1, %c0_2] : memref<64x256xbf16, #tpu.memory_space<vmem>>, vector<64x256xbf16>
    %c0_3 = arith.constant 0 : index
    %c0_4 = arith.constant 0 : index
    %2 = vector.load %arg2[%c0_3, %c0_4] : memref<256x256xbf16, #tpu.memory_space<vmem>>, vector<256x256xbf16>
    %c0_5 = arith.constant 0 : index
    %c0_6 = arith.constant 0 : index
    %3 = vector.load %arg3[%c0_5, %c0_6] : memref<1x896xf32, #tpu.memory_space<vmem>>, vector<1x256xf32>
    %c0_7 = arith.constant 0 : index
    %c256 = arith.constant 256 : index
    %4 = vector.load %arg3[%c0_7, %c256] : memref<1x896xf32, #tpu.memory_space<vmem>>, vector<1x256xf32>
    %c0_8 = arith.constant 0 : index
    %c512 = arith.constant 512 : index
    %5 = vector.load %arg3[%c0_8, %c512] : memref<1x896xf32, #tpu.memory_space<vmem>>, vector<1x128xf32>
    %c0_9 = arith.constant 0 : index
    %c640 = arith.constant 640 : index
    %6 = vector.load %arg3[%c0_9, %c640] : memref<1x896xf32, #tpu.memory_space<vmem>>, vector<1x256xf32>
    %c0_10 = arith.constant 0 : index
    %7 = memref.load %arg4[%c0_10] : memref<2xf32, #tpu.memory_space<smem>>
    %c1 = arith.constant 1 : index
    %8 = memref.load %arg4[%c1] : memref<2xf32, #tpu.memory_space<smem>>
    %cst = arith.constant dense<0.000000e+00> : vector<128x256xf32>
    %9 = tpu.matmul %0, %1, %cst {dimension_numbers = #tpu.dot_dimension_numbers<[1], [0], [0], [1], [0, 0, 1, 1], [], []>} : vector<128x64xbf16>, vector<64x256xbf16>, vector<128x256xf32> -> vector<128x256xf32>
    %10 = vector.broadcast %3 : vector<1x256xf32> to vector<128x256xf32>
    %11 = arith.addf %9, %10 : vector<128x256xf32>
    %cst_11 = arith.constant 0.000000e+00 : f32
    %12 = vector.broadcast %cst_11 : f32 to vector<128x256xf32>
    %13 = arith.maximumf %11, %12 : vector<128x256xf32>
    %14 = arith.truncf %13 : vector<128x256xf32> to vector<128x256xbf16>
    %cst_12 = arith.constant dense<0.000000e+00> : vector<128x256xf32>
    %15 = tpu.matmul %14, %2, %cst_12 {dimension_numbers = #tpu.dot_dimension_numbers<[1], [0], [0], [1], [0, 0, 1, 1], [], []>} : vector<128x256xbf16>, vector<256x256xbf16>, vector<128x256xf32> -> vector<128x256xf32>
    %16 = vector.broadcast %4 : vector<1x256xf32> to vector<128x256xf32>
    %17 = arith.addf %15, %16 : vector<128x256xf32>
    %18 = vector.extract_strided_slice %17 {offsets = [0, 0], sizes = [128, 128], strides = [1, 1]} : vector<128x256xf32> to vector<128x128xf32>
    %19 = math.tanh %18 : vector<128x128xf32>
    %20 = vector.extract_strided_slice %17 {offsets = [0, 128], sizes = [128, 128], strides = [1, 1]} : vector<128x256xf32> to vector<128x128xf32>
    %21 = arith.negf %20 : vector<128x128xf32>
    %22 = math.exp %21 : vector<128x128xf32>
    %cst_13 = arith.constant 1.000000e+00 : f32
    %23 = vector.broadcast %cst_13 : f32 to vector<128x128xf32>
    %24 = arith.addf %23, %22 : vector<128x128xf32>
    %25 = arith.divf %23, %24 : vector<128x128xf32>
    %26 = arith.mulf %19, %25 : vector<128x128xf32>
    %27 = arith.truncf %26 : vector<128x128xf32> to vector<128x128xbf16>
    %28 = arith.truncf %5 : vector<1x128xf32> to vector<1x128xbf16>
    %cst_14 = arith.constant dense<0.000000e+00> : vector<1x128xf32>
    %29 = tpu.matmul %28, %27, %cst_14 {dimension_numbers = #tpu.dot_dimension_numbers<[1], [1], [0], [0], [0, 0, 1, 0], [], []>} : vector<1x128xbf16>, vector<128x128xbf16>, vector<1x128xf32> -> vector<1x128xf32>
    %30 = vector.broadcast %7 : f32 to vector<1x128xf32>
    %31 = arith.addf %29, %30 : vector<1x128xf32>
    %32 = tpu.iota {dimensions = array<i32: 1>} : vector<1x128xi32>
    %c8_i32 = arith.constant 8 : i32
    %33 = vector.broadcast %c8_i32 : i32 to vector<1x128xi32>
    %34 = arith.cmpi slt, %32, %33 : vector<1x128xi32>
    %cst_15 = arith.constant -1.000000e+30 : f32
    %35 = vector.broadcast %cst_15 : f32 to vector<1x128xf32>
    %36 = arith.select %34, %31, %35 : vector<1x128xi1>, vector<1x128xf32>
    %cst_16 = arith.constant dense<0xFF800000> : vector<1xf32>
    %37 = vector.multi_reduction <maximumf>, %36, %cst_16 [1] : vector<1x128xf32> to vector<1xf32>
    %38 = vector.shape_cast %37 : vector<1xf32> to vector<1x1xf32>
    %39 = vector.broadcast %38 : vector<1x1xf32> to vector<1x128xf32>
    %40 = arith.subf %36, %39 : vector<1x128xf32>
    %41 = math.exp %40 : vector<1x128xf32>
    %cst_17 = arith.constant dense<0.000000e+00> : vector<1xf32>
    %42 = vector.multi_reduction <add>, %41, %cst_17 [1] : vector<1x128xf32> to vector<1xf32>
    %43 = vector.shape_cast %42 : vector<1xf32> to vector<1x1xf32>
    %44 = vector.broadcast %43 : vector<1x1xf32> to vector<1x128xf32>
    %45 = arith.divf %41, %44 : vector<1x128xf32>
    %46 = arith.truncf %45 : vector<1x128xf32> to vector<1x128xbf16>
    %cst_18 = arith.constant dense<0.000000e+00> : vector<1x256xf32>
    %47 = tpu.matmul %46, %14, %cst_18 {dimension_numbers = #tpu.dot_dimension_numbers<[1], [0], [0], [1], [0, 0, 1, 1], [], []>} : vector<1x128xbf16>, vector<128x256xbf16>, vector<1x256xf32> -> vector<1x256xf32>
    %48 = arith.mulf %47, %6 : vector<1x256xf32>
    %cst_19 = arith.constant dense<0.000000e+00> : vector<1xf32>
    %49 = vector.multi_reduction <add>, %48, %cst_19 [1] : vector<1x256xf32> to vector<1xf32>
    %50 = vector.shape_cast %49 : vector<1xf32> to vector<1x1xf32>
    %51 = vector.broadcast %8 : f32 to vector<1x1xf32>
    %52 = arith.addf %50, %51 : vector<1x1xf32>
    %53 = arith.negf %52 : vector<1x1xf32>
    %54 = math.exp %53 : vector<1x1xf32>
    %cst_20 = arith.constant 1.000000e+00 : f32
    %55 = vector.broadcast %cst_20 : f32 to vector<1x1xf32>
    %56 = arith.addf %55, %54 : vector<1x1xf32>
    %57 = arith.divf %55, %56 : vector<1x1xf32>
    %c0_21 = arith.constant 0 : index
    %c0_22 = arith.constant 0 : index
    %58 = vector.load %arg5[%c0_21, %c0_22] : memref<1x1xf32, #tpu.memory_space<vmem>>, vector<1x1xf32>
    tpu.vector_store %arg5[%c0_21, %c0_22], %57 {strides = array<i32>} : memref<1x1xf32, #tpu.memory_space<vmem>>, vector<1x1xf32>,
    %c0_23 = arith.constant 0 : index
    %c0_24 = arith.constant 0 : index
    %59 = vector.load %arg6[%c0_23, %c0_24] : memref<1x128xf32, #tpu.memory_space<vmem>>, vector<1x128xf32>
    tpu.vector_store %arg6[%c0_23, %c0_24], %45 {strides = array<i32>} : memref<1x128xf32, #tpu.memory_space<vmem>>, vector<1x128xf32>,
    return
  }
}

</mosaic_0001>

<llo_original>
// kernel: gated_attention_forward.1
$region0: #{gated_attention_forward.1}
  #allocation0 [shape = 'u32[]', space=smem, size = 0x4, offset = 0x4, fixed_abs, tag = 'smem constant byte address 0x4 - core index']
  #allocation1 [shape = 'u32[144,128]{1,0:T(1,128)}', space=vmem, size = 0x12000, scoped, tag = 'internal scratch']
  %s0 = inlined_call_operand.vmem [shape: bf16[128,64], index: 0, kind: input, shape index: {}]
  %s1 = inlined_call_operand.vmem [shape: bf16[64,256], index: 1, kind: input, shape index: {}]
  %s2 = inlined_call_operand.hbm [shape: bf16[256,256], index: 2, kind: input, shape index: {}]
  %s3 = inlined_call_operand.vmem [shape: f32[1,896], index: 3, kind: input, shape index: {}]
  %s4 = inlined_call_operand.vmem [shape: f32[2], index: 4, kind: input, shape index: {}]
  %s5 = inlined_call_operand.hbm [shape: f32[1,1], index: 5, kind: output, shape index: {0}]
  %s6 = inlined_call_operand.hbm [shape: f32[1,128], index: 6, kind: output, shape index: {1}]
  %7 = xla_tuple %s5, %s6
  %s8 = sld [smem:[#allocation0]]
  $region46: #{gated_attention_forward.1} parent=0
    _
  %s10 = ssub.s32 1, %s8
  %s11 = scalar_select 0, %s10, %s8
  $region1: #{gated_attention_forward.1} parent=0
    #allocation2 [shape = 'u8[131072]{0}', space=vmem, size = 0x20000, scoped, tag = 'input window, operand 2, single buffered']
    #allocation3 [shape = 's32[1]{0}', space=sflag, size = 0x4, scoped, tag = 'scoped memory for gated_attention_forward.1']
    #allocation4 [shape = 's32[1]{0}', space=sflag, size = 0x4, scoped, tag = 'scoped memory for gated_attention_forward.1']
    #allocation5 [shape = 's32[1]{0}', space=sflag, size = 0x4, scoped, tag = 'scoped memory for gated_attention_forward.1']
    #allocation6 [shape = 'u8[512]{0}', space=smem, size = 0x200, scoped, tag = 'input window, operand 4, single buffered']
    #allocation7 [shape = 'u8[512]{0}', space=vmem, size = 0x400, scoped, tag = 'output window, operand 0, single buffered']
    #allocation8 [shape = 'u8[512]{0}', space=vmem, size = 0x400, scoped, tag = 'output window, operand 1, single buffered']
    #allocation9 [shape = 's32[1]{0}', space=sflag, size = 0x4, scoped, tag = 'scoped memory for gated_attention_forward.1']
    %12 = vsyncpa [#allocation3], 0
    %13 = vsyncpa [#allocation5], 0
    %14 = vsyncpa [#allocation4], 0
    %15 = vsyncpa [#allocation9], 0
    // Predicated region
    $region2: #{gated_attention_forward.1} parent=1 // pred_check
      _
    $region3: #{gated_attention_forward.1} parent=1 // pred_check_branch
      %17 = sbr.rel (0) target = $region5
    $region4: #{gated_attention_forward.1} parent=1 // pred_region
      _
    $region5: #{gated_attention_forward.1} parent=1 // pred_fallthru
      _
    // Predicated region
    $region6: #{gated_attention_forward.1} parent=1 // pred_check
      _
    $region7: #{gated_attention_forward.1} parent=1 // pred_check_branch
      %19 = sbr.rel (0) target = $region9
    $region8: #{gated_attention_forward.1} parent=1 // pred_region
      _
    $region9: #{gated_attention_forward.1} parent=1 // pred_fallthru
      _
    // Predicated region
    $region10: #{gated_attention_forward.1} parent=1 // pred_check
      _
    $region11: #{gated_attention_forward.1} parent=1 // pred_check_branch
      %21 = sbr.rel (0) target = $region13
    $region12: #{gated_attention_forward.1} parent=1 // pred_region
      %s23 = ssub.s32 4096, 4096
      %24 = vsyncadd [#allocation3], %s23
      %s25 = sshll.u32 [#allocation2], 4
      %s26 = int_to_ptr.vmem [resolvable:$true] %s25
      %31 = dma.hbm_to_vmem [thread:$0]  %s2, 4096, %s26, [#allocation3], 128, 128, 8
    $region13: #{gated_attention_forward.1} parent=1 // pred_fallthru
      _
    // Predicated region
    $region14: #{gated_attention_forward.1} parent=1 // pred_check
      _
    $region15: #{gated_attention_forward.1} parent=1 // pred_check_branch
      %33 = sbr.rel (0) target = $region17
    $region16: #{gated_attention_forward.1} parent=1 // pred_region
      _
    $region17: #{gated_attention_forward.1} parent=1 // pred_fallthru
      _
    // Predicated region
    $region18: #{gated_attention_forward.1} parent=1 // pred_check
      _
    $region19: #{gated_attention_forward.1} parent=1 // pred_check_branch
      %35 = sbr.rel (0) target = $region21
    $region20: #{gated_attention_forward.1} parent=1 // pred_region
      %s37 = ssub.s32 16, 16
      %38 = vsyncadd [#allocation5], %s37
      %s40 = sshll.u32 %s4, 4
      %s41 = int_to_ptr.vmem [resolvable:$true] %s40
      %43 = dma.vmem_to_smem %s41, 16, [#allocation6], [#allocation5]
    $region21: #{gated_attention_forward.1} parent=1 // pred_fallthru
      _
    // Predicated region
    $region22: #{gated_attention_forward.1} parent=1 // pred_check
      _
    $region23: #{gated_attention_forward.1} parent=1 // pred_check_branch
      %45 = sbr.rel (0) target = $region25
    $region24: #{gated_attention_forward.1} parent=1 // pred_region
      %46 = dma.done [#allocation3], 4096
    $region25: #{gated_attention_forward.1} parent=1 // pred_fallthru
      _
    // Predicated region
    $region26: #{gated_attention_forward.1} parent=1 // pred_check
      _
    $region27: #{gated_attention_forward.1} parent=1 // pred_check_branch
      %48 = sbr.rel (0) target = $region29
    $region28: #{gated_attention_forward.1} parent=1 // pred_region
      %49 = dma.done [#allocation5], 16
    $region29: #{gated_attention_forward.1} parent=1 // pred_fallthru
      _
    %50 = sfence
    %v52 = vld [vmem:[%s0] sm:$0xf]
    %v53 = vld [vmem:[%s0 + $0x4] sm:$0xf]
    %v54 = vld [vmem:[%s0 + $0x8] sm:$0xf]
    %v55 = vld [vmem:[%s0 + $0xc] sm:$0xf]
    %v56 = vld [vmem:[%s0 + $0x10] sm:$0xf]
    %v57 = vld [vmem:[%s0 + $0x14] sm:$0xf]
    %v58 = vld [vmem:[%s0 + $0x18] sm:$0xf]
    %v59 = vld [vmem:[%s0 + $0x1c] sm:$0xf]
    %v60 = vld [vmem:[%s0 + $0x20] sm:$0xf]
    %v61 = vld [vmem:[%s0 + $0x24] sm:$0xf]
    %v62 = vld [vmem:[%s0 + $0x28] sm:$0xf]
    %v63 = vld [vmem:[%s0 + $0x2c] sm:$0xf]
    %v64 = vld [vmem:[%s0 + $0x30] sm:$0xf]
    %v65 = vld [vmem:[%s0 + $0x34] sm:$0xf]
    %v66 = vld [vmem:[%s0 + $0x38] sm:$0xf]
    %v67 = vld [vmem:[%s0 + $0x3c] sm:$0xf]
    %v68 = vld [vmem:[%s1] sm:$0xff]
    %v69 = vld [vmem:[%s1 + $0x8] sm:$0xff]
    %v70 = vld [vmem:[%s1 + $0x10] sm:$0xff]
    %v71 = vld [vmem:[%s1 + $0x18] sm:$0xff]
    %v72 = vld [vmem:[%s1 + $0x20] sm:$0xff]
    %v73 = vld [vmem:[%s1 + $0x28] sm:$0xff]
    %v74 = vld [vmem:[%s1 + $0x30] sm:$0xff]
    %v75 = vld [vmem:[%s1 + $0x38] sm:$0xff]
    %v76 = vld [vmem:[#allocation2] sm:$0xff]
    %v77 = vld [vmem:[#allocation2 + $0x8] sm:$0xff]
    %v78 = vld [vmem:[#allocation2 + $0x10] sm:$0xff]
    %v79 = vld [vmem:[#allocation2 + $0x18] sm:$0xff]
    %v80 = vld [vmem:[#allocation2 + $0x20] sm:$0xff]
    %v81 = vld [vmem:[#allocation2 + $0x28] sm:$0xff]
    %v82 = vld [vmem:[#allocation2 + $0x30] sm:$0xff]
    %v83 = vld [vmem:[#allocation2 + $0x38] sm:$0xff]
    %v84 = vld [vmem:[#allocation2 + $0x40] sm:$0xff]
    %v85 = vld [vmem:[#allocation2 + $0x48] sm:$0xff]
    %v86 = vld [vmem:[#allocation2 + $0x50] sm:$0xff]
    %v87 = vld [vmem:[#allocation2 + $0x58] sm:$0xff]
    %v88 = vld [vmem:[#allocation2 + $0x60] sm:$0xff]
    %v89 = vld [vmem:[#allocation2 + $0x68] sm:$0xff]
    %v90 = vld [vmem:[#allocation2 + $0x70] sm:$0xff]
    %v91 = vld [vmem:[#allocation2 + $0x78] sm:$0xff]
    %v92 = vld [vmem:[#allocation2 + $0x80] sm:$0xff]
    %v93 = vld [vmem:[#allocation2 + $0x88] sm:$0xff]
    %v94 = vld [vmem:[#allocation2 + $0x90] sm:$0xff]
    %v95 = vld [vmem:[#allocation2 + $0x98] sm:$0xff]
    %v96 = vld [vmem:[#allocation2 + $0xa0] sm:$0xff]
    %v97 = vld [vmem:[#allocation2 + $0xa8] sm:$0xff]
    %v98 = vld [vmem:[#allocation2 + $0xb0] sm:$0xff]
    %v99 = vld [vmem:[#allocation2 + $0xb8] sm:$0xff]
    %v100 = vld [vmem:[#allocation2 + $0xc0] sm:$0xff]
    %v101 = vld [vmem:[#allocation2 + $0xc8] sm:$0xff]
    %v102 = vld [vmem:[#allocation2 + $0xd0] sm:$0xff]
    %v103 = vld [vmem:[#allocation2 + $0xd8] sm:$0xff]
    %v104 = vld [vmem:[#allocation2 + $0xe0] sm:$0xff]
    %v105 = vld [vmem:[#allocation2 + $0xe8] sm:$0xff]
    %v106 = vld [vmem:[#allocation2 + $0xf0] sm:$0xff]
    %v107 = vld [vmem:[#allocation2 + $0xf8] sm:$0xff]
    %v108 = vld [vmem:[%s3] sm:$0x3]
    %v109 = vld [vmem:[%s3 + $0x2] sm:$0x3]
    %v110 = vld [vmem:[%s3 + $0x4] sm:$0x1]
    %v111 = vld [vmem:[%s3 + $0x5] sm:$0x3]
    %s112 = sld [smem:[#allocation6]]
    %s113 = sld [smem:[#allocation6 + $0x1]]
    %v115 = vlaneseq
    %v116 = vshrl.u32 %v115, 7
    %v117 = vsub.s32 0, %v116
    %v118 = vrot.slane %v108, %v117
    %v119 = vlaneseq
    %v120 = vshrl.u32 %v119, 7
    %v121 = vsub.s32 1, %v120
    %v122 = vrot.slane %v108, %v121
    %v141 = vunpack.c.l.b16 %v52
    %v142 = vunpack.c.l.b16 %v53
    %v143 = vunpack.c.l.b16 %v54
    %v144 = vunpack.c.l.b16 %v55
    %v145 = vunpack.c.l.b16 %v56
    %v146 = vunpack.c.l.b16 %v57
    %v147 = vunpack.c.l.b16 %v58
    %v148 = vunpack.c.l.b16 %v59
    %v149 = vunpack.c.l.b16 %v60
    %v150 = vunpack.c.l.b16 %v61
    %v151 = vunpack.c.l.b16 %v62
    %v152 = vunpack.c.l.b16 %v63
    %v153 = vunpack.c.l.b16 %v64
    %v154 = vunpack.c.l.b16 %v65
    %v155 = vunpack.c.l.b16 %v66
    %v156 = vunpack.c.l.b16 %v67
    %v157 = vpack.c.b16 %v142, %v141
    %v158 = vpack.c.b16 %v144, %v143
    %v159 = vpack.c.b16 %v146, %v145
    %v160 = vpack.c.b16 %v148, %v147
    %v161 = vpack.c.b16 %v150, %v149
    %v162 = vpack.c.b16 %v152, %v151
    %v163 = vpack.c.b16 %v154, %v153
    %v164 = vpack.c.b16 %v156, %v155
    %v173 = vunpack.c.l.b16 %v68
    %v174 = vunpack.c.h.b16 %v68
    %v175 = vunpack.c.l.b16 %v69
    %v176 = vunpack.c.h.b16 %v69
    %v177 = vunpack.c.l.b16 %v70
    %v178 = vunpack.c.h.b16 %v70
    %v179 = vunpack.c.l.b16 %v71
    %v180 = vunpack.c.h.b16 %v71
    %v181 = vunpack.c.l.b16 %v72
    %v182 = vunpack.c.h.b16 %v72
    %v183 = vunpack.c.l.b16 %v73
    %v184 = vunpack.c.h.b16 %v73
    %v185 = vunpack.c.l.b16 %v74
    %v186 = vunpack.c.h.b16 %v74
    %v187 = vunpack.c.l.b16 %v75
    %v188 = vunpack.c.h.b16 %v75
    %v189 = vpack.c.b16 %v175, %v173
    %v190 = vpack.c.b16 %v176, %v174
    %v191 = vpack.c.b16 %v179, %v177
    %v192 = vpack.c.b16 %v180, %v178
    %v193 = vpack.c.b16 %v183, %v181
    %v194 = vpack.c.b16 %v184, %v182
    %v195 = vpack.c.b16 %v187, %v185
    %v196 = vpack.c.b16 %v188, %v186
    %vm205 = vcmask 523264
    %v207 = vsel %vm205, %v157, 0
    %v210 = vsel %vm205, %v158, 0
    %v213 = vsel %vm205, %v159, 0
    %v216 = vsel %vm205, %v160, 0
    %v219 = vsel %vm205, %v161, 0
    %v222 = vsel %vm205, %v162, 0
    %v225 = vsel %vm205, %v163, 0
    %v228 = vsel %vm205, %v164, 0
    %230 = vmatprep.subr.bf16.mxu0 0
    %231 = vmatpush1.bf16.msra.mxu0 0
    %232 = vmatprep.subr.bf16.mxu0 0
    %233 = vmatpush1.bf16.msra.mxu0 0
    %234 = vmatprep.subr.bf16.mxu0 0
    %235 = vmatpush1.bf16.msra.mxu0 0
    %236 = vmatprep.subr.bf16.mxu0 0
    %237 = vmatpush1.bf16.msra.mxu0 0
    %238 = vmatprep.subr.bf16.mxu0 %v196
    %239 = vmatpush1.bf16.msra.mxu0 %v195
    %240 = vmatprep.subr.bf16.mxu0 %v194
    %241 = vmatpush1.bf16.msra.mxu0 %v193
    %242 = vmatprep.subr.bf16.mxu0 %v192
    %243 = vmatpush1.bf16.msra.mxu0 %v191
    %244 = vmatprep.subr.bf16.mxu0 %v190
    %245 = vmatpush1.bf16.msra.mxu0 %v189
    %246 = vmatprep.subr.bf16.mxu0 0
    %247 = vmatpush2.bf16.msra.mxu0 0
    %248 = vmatprep.subr.bf16.mxu0 0
    %249 = vmatpush2.bf16.msra.mxu0 0
    %250 = vmatprep.subr.bf16.mxu0 0
    %251 = vmatpush2.bf16.msra.mxu0 0
    %252 = vmatprep.subr.bf16.mxu0 0
    %253 = vmatpush2.bf16.msra.mxu0 0
    %254 = vmatprep.subr.bf16.mxu0 0
    %255 = vmatpush2.bf16.msra.mxu0 0
    %256 = vmatprep.subr.bf16.mxu0 0
    %257 = vmatpush2.bf16.msra.mxu0 0
    %258 = vmatprep.subr.bf16.mxu0 0
    %259 = vmatpush2.bf16.msra.mxu0 0
    %260 = vmatprep.subr.bf16.mxu0 0
    %261 = vmatpush2.bf16.msra.mxu0 0
    %262 = vmatprep.mubr.bf16.mxu0 0
    %263 = vmatmul.mubr.bf16.gmra.mxu0 %v207
    %v264 = vpop.f32.mrf.mxu0
    %v265 = vadd.f32 %v118, %v264
    %v266 = vpop.f32.mrf.mxu0
    %v267 = vadd.f32 %v122, %v266
    %v268 = vpop.f32.mrf.mxu0
    %v269 = vadd.f32 %v118, %v268
    %v270 = vpop.f32.mrf.mxu0
    %v271 = vadd.f32 %v122, %v270
    %272 = vmatprep.mubr.bf16.mxu0 0
    %273 = vmatmul.mubr.bf16.gmra.mxu0 %v210
    %v274 = vpop.f32.mrf.mxu0
    %v275 = vadd.f32 %v118, %v274
    %v276 = vpop.f32.mrf.mxu0
    %v277 = vadd.f32 %v122, %v276
    %v278 = vpop.f32.mrf.mxu0
    %v279 = vadd.f32 %v118, %v278
    %v280 = vpop.f32.mrf.mxu0
    %v281 = vadd.f32 %v122, %v280
    %282 = vmatprep.mubr.bf16.mxu0 0
    %283 = vmatmul.mubr.bf16.gmra.mxu0 %v213
    %v284 = vpop.f32.mrf.mxu0
    %v285 = vadd.f32 %v118, %v284
    %v286 = vpop.f32.mrf.mxu0
    %v287 = vadd.f32 %v122, %v286
    %v288 = vpop.f32.mrf.mxu0
    %v289 = vadd.f32 %v118, %v288
    %v290 = vpop.f32.mrf.mxu0
    %v291 = vadd.f32 %v122, %v290
    %292 = vmatprep.mubr.bf16.mxu0 0
    %293 = vmatmul.mubr.bf16.gmra.mxu0 %v216
    %v294 = vpop.f32.mrf.mxu0
    %v295 = vadd.f32 %v118, %v294
    %v296 = vpop.f32.mrf.mxu0
    %v297 = vadd.f32 %v122, %v296
    %v298 = vpop.f32.mrf.mxu0
    %v299 = vadd.f32 %v118, %v298
    %v300 = vpop.f32.mrf.mxu0
    %v301 = vadd.f32 %v122, %v300
    %302 = vmatprep.mubr.bf16.mxu0 0
    %303 = vmatmul.mubr.bf16.gmra.mxu0 %v219
    %v304 = vpop.f32.mrf.mxu0
    %v305 = vadd.f32 %v118, %v304
    %v306 = vpop.f32.mrf.mxu0
    %v307 = vadd.f32 %v122, %v306
    %v308 = vpop.f32.mrf.mxu0
    %v309 = vadd.f32 %v118, %v308
    %v310 = vpop.f32.mrf.mxu0
    %v311 = vadd.f32 %v122, %v310
    %312 = vmatprep.mubr.bf16.mxu0 0
    %313 = vmatmul.mubr.bf16.gmra.mxu0 %v222
    %v314 = vpop.f32.mrf.mxu0
    %v315 = vadd.f32 %v118, %v314
    %v316 = vpop.f32.mrf.mxu0
    %v317 = vadd.f32 %v122, %v316
    %v318 = vpop.f32.mrf.mxu0
    %v319 = vadd.f32 %v118, %v318
    %v320 = vpop.f32.mrf.mxu0
    %v321 = vadd.f32 %v122, %v320
    %322 = vmatprep.mubr.bf16.mxu0 0
    %323 = vmatmul.mubr.bf16.gmra.mxu0 %v225
    %v324 = vpop.f32.mrf.mxu0
    %v325 = vadd.f32 %v118, %v324
    %v326 = vpop.f32.mrf.mxu0
    %v327 = vadd.f32 %v122, %v326
    %v328 = vpop.f32.mrf.mxu0
    %v329 = vadd.f32 %v118, %v328
    %v330 = vpop.f32.mrf.mxu0
    %v331 = vadd.f32 %v122, %v330
    %332 = vmatprep.mubr.bf16.mxu0 0
    %333 = vmatmul.mubr.bf16.gmra.mxu0 %v228
    %v334 = vpop.f32.mrf.mxu0
    %v335 = vadd.f32 %v118, %v334
    %v336 = vpop.f32.mrf.mxu0
    %v337 = vadd.f32 %v122, %v336
    %v338 = vpop.f32.mrf.mxu0
    %v339 = vadd.f32 %v118, %v338
    %v340 = vpop.f32.mrf.mxu0
    %v341 = vadd.f32 %v122, %v340
    %342 = vdwg.mxu0
    %v343 = vmax.f32 %v265, 0.0
    %v344 = vmax.f32 %v267, 0.0
    %v345 = vmax.f32 %v269, 0.0
    %v346 = vmax.f32 %v271, 0.0
    %v347 = vmax.f32 %v275, 0.0
    %v348 = vmax.f32 %v277, 0.0
    %v349 = vmax.f32 %v279, 0.0
    %v350 = vmax.f32 %v281, 0.0
    %v351 = vmax.f32 %v285, 0.0
    %v352 = vmax.f32 %v287, 0.0
    %v353 = vmax.f32 %v289, 0.0
    %v354 = vmax.f32 %v291, 0.0
    %v355 = vmax.f32 %v295, 0.0
    %v356 = vmax.f32 %v297, 0.0
    %v357 = vmax.f32 %v299, 0.0
    %v358 = vmax.f32 %v301, 0.0
    %v359 = vmax.f32 %v305, 0.0
    %v360 = vmax.f32 %v307, 0.0
    %v361 = vmax.f32 %v309, 0.0
    %v362 = vmax.f32 %v311, 0.0
    %v363 = vmax.f32 %v315, 0.0
    %v364 = vmax.f32 %v317, 0.0
    %v365 = vmax.f32 %v319, 0.0
    %v366 = vmax.f32 %v321, 0.0
    %v367 = vmax.f32 %v325, 0.0
    %v368 = vmax.f32 %v327, 0.0
    %v369 = vmax.f32 %v329, 0.0
    %v370 = vmax.f32 %v331, 0.0
    %v371 = vmax.f32 %v335, 0.0
    %v372 = vmax.f32 %v337, 0.0
    %v373 = vmax.f32 %v339, 0.0
    %v374 = vmax.f32 %v341, 0.0
    %v375 = vpack.c.bf16 %v345, %v343
    %v376 = vpack.c.bf16 %v346, %v344
    %v377 = vpack.c.bf16 %v349, %v347
    %v378 = vpack.c.bf16 %v350, %v348
    %v379 = vpack.c.bf16 %v353, %v351
    %v380 = vpack.c.bf16 %v354, %v352
    %v381 = vpack.c.bf16 %v357, %v355
    %v382 = vpack.c.bf16 %v358, %v356
    %v383 = vpack.c.bf16 %v361, %v359
    %v384 = vpack.c.bf16 %v362, %v360
    %v385 = vpack.c.bf16 %v365, %v363
    %v386 = vpack.c.bf16 %v366, %v364
    %v387 = vpack.c.bf16 %v369, %v367
    %v388 = vpack.c.bf16 %v370, %v368
    %v389 = vpack.c.bf16 %v373, %v371
    %v390 = vpack.c.bf16 %v374, %v372
    %v392 = vlaneseq
    %v393 = vshrl.u32 %v392, 7
    %v394 = vsub.s32 0, %v393
    %v395 = vrot.slane %v109, %v394
    %v396 = vlaneseq
    %v397 = vshrl.u32 %v396, 7
    %v398 = vsub.s32 1, %v397
    %v399 = vrot.slane %v109, %v398
    %v434 = vunpack.c.l.b16 %v76
    %v435 = vunpack.c.h.b16 %v76
    %v436 = vunpack.c.l.b16 %v77
    %v437 = vunpack.c.h.b16 %v77
    %v438 = vunpack.c.l.b16 %v78
    %v439 = vunpack.c.h.b16 %v78
    %v440 = vunpack.c.l.b16 %v79
    %v441 = vunpack.c.h.b16 %v79
    %v442 = vunpack.c.l.b16 %v80
    %v443 = vunpack.c.h.b16 %v80
    %v444 = vunpack.c.l.b16 %v81
    %v445 = vunpack.c.h.b16 %v81
    %v446 = vunpack.c.l.b16 %v82
    %v447 = vunpack.c.h.b16 %v82
    %v448 = vunpack.c.l.b16 %v83
    %v449 = vunpack.c.h.b16 %v83
    %v450 = vunpack.c.l.b16 %v84
    %v451 = vunpack.c.h.b16 %v84
    %v452 = vunpack.c.l.b16 %v85
    %v453 = vunpack.c.h.b16 %v85
    %v454 = vunpack.c.l.b16 %v86
    %v455 = vunpack.c.h.b16 %v86
    %v456 = vunpack.c.l.b16 %v87
    %v457 = vunpack.c.h.b16 %v87
    %v458 = vunpack.c.l.b16 %v88
    %v459 = vunpack.c.h.b16 %v88
    %v460 = vunpack.c.l.b16 %v89
    %v461 = vunpack.c.h.b16 %v89
    %v462 = vunpack.c.l.b16 %v90
    %v463 = vunpack.c.h.b16 %v90
    %v464 = vunpack.c.l.b16 %v91
    %v465 = vunpack.c.h.b16 %v91
    %v466 = vunpack.c.l.b16 %v92
    %v467 = vunpack.c.h.b16 %v92
    %v468 = vunpack.c.l.b16 %v93
    %v469 = vunpack.c.h.b16 %v93
    %v470 = vunpack.c.l.b16 %v94
    %v471 = vunpack.c.h.b16 %v94
    %v472 = vunpack.c.l.b16 %v95
    %v473 = vunpack.c.h.b16 %v95
    %v474 = vunpack.c.l.b16 %v96
    %v475 = vunpack.c.h.b16 %v96
    %v476 = vunpack.c.l.b16 %v97
    %v477 = vunpack.c.h.b16 %v97
    %v478 = vunpack.c.l.b16 %v98
    %v479 = vunpack.c.h.b16 %v98
    %v480 = vunpack.c.l.b16 %v99
    %v481 = vunpack.c.h.b16 %v99
    %v482 = vunpack.c.l.b16 %v100
    %v483 = vunpack.c.h.b16 %v100
    %v484 = vunpack.c.l.b16 %v101
    %v485 = vunpack.c.h.b16 %v101
    %v486 = vunpack.c.l.b16 %v102
    %v487 = vunpack.c.h.b16 %v102
    %v488 = vunpack.c.l.b16 %v103
    %v489 = vunpack.c.h.b16 %v103
    %v490 = vunpack.c.l.b16 %v104
    %v491 = vunpack.c.h.b16 %v104
    %v492 = vunpack.c.l.b16 %v105
    %v493 = vunpack.c.h.b16 %v105
    %v494 = vunpack.c.l.b16 %v106
    %v495 = vunpack.c.h.b16 %v106
    %v496 = vunpack.c.l.b16 %v107
    %v497 = vunpack.c.h.b16 %v107
    %v498 = vpack.c.b16 %v436, %v434
    %v499 = vpack.c.b16 %v437, %v435
    %v500 = vpack.c.b16 %v440, %v438
    %v501 = vpack.c.b16 %v441, %v439
    %v502 = vpack.c.b16 %v444, %v442
    %v503 = vpack.c.b16 %v445, %v443
    %v504 = vpack.c.b16 %v448, %v446
    %v505 = vpack.c.b16 %v449, %v447
    %v506 = vpack.c.b16 %v452, %v450
    %v507 = vpack.c.b16 %v453, %v451
    %v508 = vpack.c.b16 %v456, %v454
    %v509 = vpack.c.b16 %v457, %v455
    %v510 = vpack.c.b16 %v460, %v458
    %v511 = vpack.c.b16 %v461, %v459
    %v512 = vpack.c.b16 %v464, %v462
    %v513 = vpack.c.b16 %v465, %v463
    %v514 = vpack.c.b16 %v468, %v466
    %v515 = vpack.c.b16 %v469, %v467
    %v516 = vpack.c.b16 %v472, %v470
    %v517 = vpack.c.b16 %v473, %v471
    %v518 = vpack.c.b16 %v476, %v474
    %v519 = vpack.c.b16 %v477, %v475
    %v520 = vpack.c.b16 %v480, %v478
    %v521 = vpack.c.b16 %v481, %v479
    %v522 = vpack.c.b16 %v484, %v482
    %v523 = vpack.c.b16 %v485, %v483
    %v524 = vpack.c.b16 %v488, %v486
    %v525 = vpack.c.b16 %v489, %v487
    %v526 = vpack.c.b16 %v492, %v490
    %v527 = vpack.c.b16 %v493, %v491
    %v528 = vpack.c.b16 %v496, %v494
    %v529 = vpack.c.b16 %v497, %v495
    %562 = vmatprep.subr.bf16.mxu0 %v513
    %563 = vmatpush1.bf16.msra.mxu0 %v512
    %564 = vmatprep.subr.bf16.mxu0 %v511
    %565 = vmatpush1.bf16.msra.mxu0 %v510
    %566 = vmatprep.subr.bf16.mxu0 %v509
    %567 = vmatpush1.bf16.msra.mxu0 %v508
    %568 = vmatprep.subr.bf16.mxu0 %v507
    %569 = vmatpush1.bf16.msra.mxu0 %v506
    %570 = vmatprep.subr.bf16.mxu0 %v505
    %571 = vmatpush1.bf16.msra.mxu0 %v504
    %572 = vmatprep.subr.bf16.mxu0 %v503
    %573 = vmatpush1.bf16.msra.mxu0 %v502
    %574 = vmatprep.subr.bf16.mxu0 %v501
    %575 = vmatpush1.bf16.msra.mxu0 %v500
    %576 = vmatprep.subr.bf16.mxu0 %v499
    %577 = vmatpush1.bf16.msra.mxu0 %v498
    %578 = vmatprep.subr.bf16.mxu0 %v529
    %579 = vmatpush2.bf16.msra.mxu0 %v528
    %580 = vmatprep.subr.bf16.mxu0 %v527
    %581 = vmatpush2.bf16.msra.mxu0 %v526
    %582 = vmatprep.subr.bf16.mxu0 %v525
    %583 = vmatpush2.bf16.msra.mxu0 %v524
    %584 = vmatprep.subr.bf16.mxu0 %v523
    %585 = vmatpush2.bf16.msra.mxu0 %v522
    %586 = vmatprep.subr.bf16.mxu0 %v521
    %587 = vmatpush2.bf16.msra.mxu0 %v520
    %588 = vmatprep.subr.bf16.mxu0 %v519
    %589 = vmatpush2.bf16.msra.mxu0 %v518
    %590 = vmatprep.subr.bf16.mxu0 %v517
    %591 = vmatpush2.bf16.msra.mxu0 %v516
    %592 = vmatprep.subr.bf16.mxu0 %v515
    %593 = vmatpush2.bf16.msra.mxu0 %v514
    %594 = vmatprep.mubr.bf16.mxu0 %v376
    %595 = vmatmul.mubr.bf16.gmra.mxu0 %v375
    %v596 = vpop.f32.mrf.mxu0
    %v597 = vadd.f32 %v395, %v596
    %v598 = vpop.f32.mrf.mxu0
    %v599 = vadd.f32 %v399, %v598
    %v600 = vpop.f32.mrf.mxu0
    %v601 = vadd.f32 %v395, %v600
    %v602 = vpop.f32.mrf.mxu0
    %v603 = vadd.f32 %v399, %v602
    %604 = vmatprep.mubr.bf16.mxu0 %v378
    %605 = vmatmul.mubr.bf16.gmra.mxu0 %v377
    %v606 = vpop.f32.mrf.mxu0
    %v607 = vadd.f32 %v395, %v606
    %v608 = vpop.f32.mrf.mxu0
    %v609 = vadd.f32 %v399, %v608
    %v610 = vpop.f32.mrf.mxu0
    %v611 = vadd.f32 %v395, %v610
    %v612 = vpop.f32.mrf.mxu0
    %v613 = vadd.f32 %v399, %v612
    %614 = vmatprep.mubr.bf16.mxu0 %v380
    %615 = vmatmul.mubr.bf16.gmra.mxu0 %v379
    %v616 = vpop.f32.mrf.mxu0
    %v617 = vadd.f32 %v395, %v616
    %v618 = vpop.f32.mrf.mxu0
    %v619 = vadd.f32 %v399, %v618
    %v620 = vpop.f32.mrf.mxu0
    %v621 = vadd.f32 %v395, %v620
    %v622 = vpop.f32.mrf.mxu0
    %v623 = vadd.f32 %v399, %v622
    %624 = vmatprep.mubr.bf16.mxu0 %v382
    %625 = vmatmul.mubr.bf16.gmra.mxu0 %v381
    %v626 = vpop.f32.mrf.mxu0
    %v627 = vadd.f32 %v395, %v626
    %v628 = vpop.f32.mrf.mxu0
    %v629 = vadd.f32 %v399, %v628
    %v630 = vpop.f32.mrf.mxu0
    %v631 = vadd.f32 %v395, %v630
    %v632 = vpop.f32.mrf.mxu0
    %v633 = vadd.f32 %v399, %v632
    %634 = vmatprep.mubr.bf16.mxu0 %v384
    %635 = vmatmul.mubr.bf16.gmra.mxu0 %v383
    %v636 = vpop.f32.mrf.mxu0
    %v637 = vadd.f32 %v395, %v636
    %v638 = vpop.f32.mrf.mxu0
    %v639 = vadd.f32 %v399, %v638
    %v640 = vpop.f32.mrf.mxu0
    %v641 = vadd.f32 %v395, %v640
    %v642 = vpop.f32.mrf.mxu0
    %v643 = vadd.f32 %v399, %v642
    %644 = vmatprep.mubr.bf16.mxu0 %v386
    %645 = vmatmul.mubr.bf16.gmra.mxu0 %v385
    %v646 = vpop.f32.mrf.mxu0
    %v647 = vadd.f32 %v395, %v646
    %v648 = vpop.f32.mrf.mxu0
    %v649 = vadd.f32 %v399, %v648
    %v650 = vpop.f32.mrf.mxu0
    %v651 = vadd.f32 %v395, %v650
    %v652 = vpop.f32.mrf.mxu0
    %v653 = vadd.f32 %v399, %v652
    %654 = vmatprep.mubr.bf16.mxu0 %v388
    %655 = vmatmul.mubr.bf16.gmra.mxu0 %v387
    %v656 = vpop.f32.mrf.mxu0
    %v657 = vadd.f32 %v395, %v656
    %v658 = vpop.f32.mrf.mxu0
    %v659 = vadd.f32 %v399, %v658
    %v660 = vpop.f32.mrf.mxu0
    %v661 = vadd.f32 %v395, %v660
    %v662 = vpop.f32.mrf.mxu0
    %v663 = vadd.f32 %v399, %v662
    %664 = vmatprep.mubr.bf16.mxu0 %v390
    %665 = vmatmul.mubr.bf16.gmra.mxu0 %v389
    %v666 = vpop.f32.mrf.mxu0
    %v667 = vadd.f32 %v395, %v666
    %v668 = vpop.f32.mrf.mxu0
    %v669 = vadd.f32 %v399, %v668
    %v670 = vpop.f32.mrf.mxu0
    %v671 = vadd.f32 %v395, %v670
    %v672 = vpop.f32.mrf.mxu0
    %v673 = vadd.f32 %v399, %v672
    %674 = vdwg.mxu0
    %v675 = vtanh.pop %v597
    %v676 = vtanh.pop %v601
    %v677 = vtanh.pop %v607
    %v678 = vtanh.pop %v611
    %v679 = vtanh.pop %v617
    %v680 = vtanh.pop %v621
    %v681 = vtanh.pop %v627
    %v682 = vtanh.pop %v631
    %v683 = vtanh.pop %v637
    %v684 = vtanh.pop %v641
    %v685 = vtanh.pop %v647
    %v686 = vtanh.pop %v651
    %v687 = vtanh.pop %v657
    %v688 = vtanh.pop %v661
    %v689 = vtanh.pop %v667
    %v690 = vtanh.pop %v671
    %v691 = vxor.u32 %v599, 2147483648
    %v692 = vxor.u32 %v603, 2147483648
    %v693 = vxor.u32 %v609, 2147483648
    %v694 = vxor.u32 %v613, 2147483648
    %v695 = vxor.u32 %v619, 2147483648
    %v696 = vxor.u32 %v623, 2147483648
    %v697 = vxor.u32 %v629, 2147483648
    %v698 = vxor.u32 %v633, 2147483648
    %v699 = vxor.u32 %v639, 2147483648
    %v700 = vxor.u32 %v643, 2147483648
    %v701 = vxor.u32 %v649, 2147483648
    %v702 = vxor.u32 %v653, 2147483648
    %v703 = vxor.u32 %v659, 2147483648
    %v704 = vxor.u32 %v663, 2147483648
    %v705 = vxor.u32 %v669, 2147483648
    %v706 = vxor.u32 %v673, 2147483648
    %v707 = vmul.f32 %v691, 1.442695
    %v708 = vpow.pop %v707
    %v709 = vmul.f32 %v692, 1.442695
    %v710 = vpow.pop %v709
    %v711 = vmul.f32 %v693, 1.442695
    %v712 = vpow.pop %v711
    %v713 = vmul.f32 %v694, 1.442695
    %v714 = vpow.pop %v713
    %v715 = vmul.f32 %v695, 1.442695
    %v716 = vpow.pop %v715
    %v717 = vmul.f32 %v696, 1.442695
    %v718 = vpow.pop %v717
    %v719 = vmul.f32 %v697, 1.442695
    %v720 = vpow.pop %v719
    %v721 = vmul.f32 %v698, 1.442695
    %v722 = vpow.pop %v721
    %v723 = vmul.f32 %v699, 1.442695
    %v724 = vpow.pop %v723
    %v725 = vmul.f32 %v700, 1.442695
    %v726 = vpow.pop %v725
    %v727 = vmul.f32 %v701, 1.442695
    %v728 = vpow.pop %v727
    %v729 = vmul.f32 %v702, 1.442695
    %v730 = vpow.pop %v729
    %v731 = vmul.f32 %v703, 1.442695
    %v732 = vpow.pop %v731
    %v733 = vmul.f32 %v704, 1.442695
    %v734 = vpow.pop %v733
    %v735 = vmul.f32 %v705, 1.442695
    %v736 = vpow.pop %v735
    %v737 = vmul.f32 %v706, 1.442695
    %v738 = vpow.pop %v737
    %v739 = vadd.f32 %v708, 1.0
    %v740 = vadd.f32 %v710, 1.0
    %v741 = vadd.f32 %v712, 1.0
    %v742 = vadd.f32 %v714, 1.0
    %v743 = vadd.f32 %v716, 1.0
    %v744 = vadd.f32 %v718, 1.0
    %v745 = vadd.f32 %v720, 1.0
    %v746 = vadd.f32 %v722, 1.0
    %v747 = vadd.f32 %v724, 1.0
    %v748 = vadd.f32 %v726, 1.0
    %v749 = vadd.f32 %v728, 1.0
    %v750 = vadd.f32 %v730, 1.0
    %v751 = vadd.f32 %v732, 1.0
    %v752 = vadd.f32 %v734, 1.0
    %v753 = vadd.f32 %v736, 1.0
    %v754 = vadd.f32 %v738, 1.0
    %v755 = vrcp.pop %v739
    %v756 = vmul.f32 1.0, %v755
    %v757 = vrcp.pop %v740
    %v758 = vmul.f32 1.0, %v757
    %v759 = vrcp.pop %v741
    %v760 = vmul.f32 1.0, %v759
    %v761 = vrcp.pop %v742
    %v762 = vmul.f32 1.0, %v761
    %v763 = vrcp.pop %v743
    %v764 = vmul.f32 1.0, %v763
    %v765 = vrcp.pop %v744
    %v766 = vmul.f32 1.0, %v765
    %v767 = vrcp.pop %v745
    %v768 = vmul.f32 1.0, %v767
    %v769 = vrcp.pop %v746
    %v770 = vmul.f32 1.0, %v769
    %v771 = vrcp.pop %v747
    %v772 = vmul.f32 1.0, %v771
    %v773 = vrcp.pop %v748
    %v774 = vmul.f32 1.0, %v773
    %v775 = vrcp.pop %v749
    %v776 = vmul.f32 1.0, %v775
    %v777 = vrcp.pop %v750
    %v778 = vmul.f32 1.0, %v777
    %v779 = vrcp.pop %v751
    %v780 = vmul.f32 1.0, %v779
    %v781 = vrcp.pop %v752
    %v782 = vmul.f32 1.0, %v781
    %v783 = vrcp.pop %v753
    %v784 = vmul.f32 1.0, %v783
    %v785 = vrcp.pop %v754
    %v786 = vmul.f32 1.0, %v785
    %v787 = vmul.f32 %v675, %v756
    %v788 = vmul.f32 %v676, %v758
    %v789 = vmul.f32 %v677, %v760
    %v790 = vmul.f32 %v678, %v762
    %v791 = vmul.f32 %v679, %v764
    %v792 = vmul.f32 %v680, %v766
    %v793 = vmul.f32 %v681, %v768
    %v794 = vmul.f32 %v682, %v770
    %v795 = vmul.f32 %v683, %v772
    %v796 = vmul.f32 %v684, %v774
    %v797 = vmul.f32 %v685, %v776
    %v798 = vmul.f32 %v686, %v778
    %v799 = vmul.f32 %v687, %v780
    %v800 = vmul.f32 %v688, %v782
    %v801 = vmul.f32 %v689, %v784
    %v802 = vmul.f32 %v690, %v786
    %v803 = vpack.c.bf16 %v788, %v787
    %v804 = vpack.c.bf16 %v790, %v789
    %v805 = vpack.c.bf16 %v792, %v791
    %v806 = vpack.c.bf16 %v794, %v793
    %v807 = vpack.c.bf16 %v796, %v795
    %v808 = vpack.c.bf16 %v798, %v797
    %v809 = vpack.c.bf16 %v800, %v799
    %v810 = vpack.c.bf16 %v802, %v801
    %v811 = vpack.c.bf16 %v110, %v110
    %v812 = vstv %s112
    %813 = vmatprep.subr.bf16.mxu0 0
    %814 = vmatpush1.bf16.xpose.msra.mxu0 %v810
    %815 = vmatprep.subr.bf16.mxu0 0
    %816 = vmatpush1.bf16.xpose.msra.mxu0 %v809
    %817 = vmatprep.subr.bf16.mxu0 0
    %818 = vmatpush1.bf16.xpose.msra.mxu0 %v808
    %819 = vmatprep.subr.bf16.mxu0 0
    %820 = vmatpush1.bf16.xpose.msra.mxu0 %v807
    %821 = vmatprep.subr.bf16.mxu0 0
    %822 = vmatpush1.bf16.xpose.msra.mxu0 %v806
    %823 = vmatprep.subr.bf16.mxu0 0
    %824 = vmatpush1.bf16.xpose.msra.mxu0 %v805
    %825 = vmatprep.subr.bf16.mxu0 0
    %826 = vmatpush1.bf16.xpose.msra.mxu0 %v804
    %827 = vmatprep.subr.bf16.mxu0 0
    %828 = vmatpush1.bf16.xpose.msra.mxu0 %v803
    %829 = vmatprep.subr.bf16.mxu0 0
    %830 = vmatpush2.bf16.xpose.msra.mxu0 0
    %831 = vmatprep.subr.bf16.mxu0 0
    %832 = vmatpush2.bf16.xpose.msra.mxu0 0
    %833 = vmatprep.subr.bf16.mxu0 0
    %834 = vmatpush2.bf16.xpose.msra.mxu0 0
    %835 = vmatprep.subr.bf16.mxu0 0
    %836 = vmatpush2.bf16.xpose.msra.mxu0 0
    %837 = vmatprep.subr.bf16.mxu0 0
    %838 = vmatpush2.bf16.xpose.msra.mxu0 0
    %839 = vmatprep.subr.bf16.mxu0 0
    %840 = vmatpush2.bf16.xpose.msra.mxu0 0
    %841 = vmatprep.subr.bf16.mxu0 0
    %842 = vmatpush2.bf16.xpose.msra.mxu0 0
    %843 = vmatprep.subr.bf16.mxu0 0
    %844 = vmatpush2.bf16.xpose.msra.mxu0 0
    %845 = vmatprep.mubr.bf16.mxu0 0
    %846 = vmatmul.mubr.bf16.gmra.mxu0 %v811
    %v847 = vpop.f32.mrf.mxu0
    %v848 = vadd.f32 %v812, %v847
    %v849 = vpop.f32.mrf.mxu0
    %v850 = vpop.f32.mrf.mxu0
    %v851 = vpop.f32.mrf.mxu0
    %852 = vdwg.mxu0
    %v853 = vlaneseq
    %v854 = vand.u32 %v853, 127
    %vm855 = vcmp.lt.s32.totalorder %v854, 8
    %v856 = vsel %vm855, %v848, -1e+30
    %vm857 = vcmask 1040384
    %v858 = vsel %vm857, %v856, -inf
    %859 = vmax.xlane.f32.xlu0 %v858
    %v860 = vpop.xlane.xlu0 %859
    %v861 = vsub.f32 %v856, %v860
    %v862 = vmul.f32 %v861, 1.442695
    %v863 = vpow.pop %v862
    %v864 = vsel %vm857, %v863, 0.0
    %865 = vadd.xlane.f32.xlu0 %v864
    %v866 = vpop.xlane.xlu0 %865
    %v867 = vrcp.pop %v866
    %v868 = vmul.f32 %v863, %v867
    %v869 = vpack.c.bf16 %v868, %v868
    %870 = vmatprep.subr.bf16.mxu0 %v390
    %871 = vmatpush1.bf16.msra.mxu0 %v389
    %872 = vmatprep.subr.bf16.mxu0 %v388
    %873 = vmatpush1.bf16.msra.mxu0 %v387
    %874 = vmatprep.subr.bf16.mxu0 %v386
    %875 = vmatpush1.bf16.msra.mxu0 %v385
    %876 = vmatprep.subr.bf16.mxu0 %v384
    %877 = vmatpush1.bf16.msra.mxu0 %v383
    %878 = vmatprep.subr.bf16.mxu0 %v382
    %879 = vmatpush1.bf16.msra.mxu0 %v381
    %880 = vmatprep.subr.bf16.mxu0 %v380
    %881 = vmatpush1.bf16.msra.mxu0 %v379
    %882 = vmatprep.subr.bf16.mxu0 %v378
    %883 = vmatpush1.bf16.msra.mxu0 %v377
    %884 = vmatprep.subr.bf16.mxu0 %v376
    %885 = vmatpush1.bf16.msra.mxu0 %v375
    %886 = vmatprep.subr.bf16.mxu0 0
    %887 = vmatpush2.bf16.msra.mxu0 0
    %888 = vmatprep.subr.bf16.mxu0 0
    %889 = vmatpush2.bf16.msra.mxu0 0
    %890 = vmatprep.subr.bf16.mxu0 0
    %891 = vmatpush2.bf16.msra.mxu0 0
    %892 = vmatprep.subr.bf16.mxu0 0
    %893 = vmatpush2.bf16.msra.mxu0 0
    %894 = vmatprep.subr.bf16.mxu0 0
    %895 = vmatpush2.bf16.msra.mxu0 0
    %896 = vmatprep.subr.bf16.mxu0 0
    %897 = vmatpush2.bf16.msra.mxu0 0
    %898 = vmatprep.subr.bf16.mxu0 0
    %899 = vmatpush2.bf16.msra.mxu0 0
    %900 = vmatprep.subr.bf16.mxu0 0
    %901 = vmatpush2.bf16.msra.mxu0 0
    %902 = vmatprep.mubr.bf16.mxu0 0
    %903 = vmatmul.mubr.bf16.gmra.mxu0 %v869
    %v904 = vpop.f32.mrf.mxu0
    %v905 = vadd.f32 0.0, %v904
    %v906 = vpop.f32.mrf.mxu0
    %v907 = vadd.f32 0.0, %v906
    %v908 = vpop.f32.mrf.mxu0
    %v909 = vpop.f32.mrf.mxu0
    %910 = vdwg.mxu0
    %v912 = vlaneseq
    %v913 = vshrl.u32 %v912, 7
    %v914 = vsub.s32 0, %v913
    %v915 = vrot.slane %v111, %v914
    %v916 = vlaneseq
    %v917 = vshrl.u32 %v916, 7
    %v918 = vsub.s32 1, %v917
    %v919 = vrot.slane %v111, %v918
    %v922 = vmul.f32 %v905, %v915
    %v923 = vmul.f32 %v907, %v919
    %v924 = vsel %vm857, %v922, 0.0
    %v925 = vsel %vm857, %v923, 0.0
    %v926 = vadd.f32 %v924, %v925
    %927 = vadd.xlane.f32.xlu0 %v926
    %v928 = vpop.xlane.xlu0 %927
    %v929 = vstv %s113
    %v930 = vadd.f32 %v928, %v929
    %v931 = vxor.u32 %v930, 2147483648
    %v932 = vmul.f32 %v931, 1.442695
    %v933 = vpow.pop %v932
    %v934 = vadd.f32 %v933, 1.0
    %v935 = vrcp.pop %v934
    %v936 = vmul.f32 1.0, %v935
    %vm937 = vcmask 0
    %938 = vst.msk [vmem:[#allocation7] sm:$0x1] %vm937, %v936
    %939 = vst [vmem:[#allocation8] sm:$0x1] %v868
    // Predicated region
    $region30: #{gated_attention_forward.1} parent=1 // pred_check
      _
    $region31: #{gated_attention_forward.1} parent=1 // pred_check_branch
      %941 = sbr.rel (0) target = $region33
    $region32: #{gated_attention_forward.1} parent=1 // pred_region
      %s943 = ssub.s32 16, 16
      %944 = vsyncadd [#allocation4], %s943
      %s946 = sshll.u32 [#allocation7], 4
      %s947 = int_to_ptr.vmem [resolvable:$true] %s946
      %949 = dma.vmem_to_hbm [thread:$0]  %s947, 16, %s5, [#allocation4]
    $region33: #{gated_attention_forward.1} parent=1 // pred_fallthru
      _
    // Predicated region
    $region34: #{gated_attention_forward.1} parent=1 // pred_check
      _
    $region35: #{gated_attention_forward.1} parent=1 // pred_check_branch
      %951 = sbr.rel (0) target = $region37
    $region36: #{gated_attention_forward.1} parent=1 // pred_region
      %s953 = ssub.s32 16, 16
      %954 = vsyncadd [#allocation9], %s953
      %s956 = sshll.u32 [#allocation8], 4
      %s957 = int_to_ptr.vmem [resolvable:$true] %s956
      %959 = dma.vmem_to_hbm [thread:$0]  %s957, 16, %s6, [#allocation9]
    $region37: #{gated_attention_forward.1} parent=1 // pred_fallthru
      _
    // Predicated region
    $region38: #{gated_attention_forward.1} parent=1 // pred_check
      _
    $region39: #{gated_attention_forward.1} parent=1 // pred_check_branch
      %961 = sbr.rel (0) target = $region41
    $region40: #{gated_attention_forward.1} parent=1 // pred_region
      %962 = dma.done [#allocation4], 16
    $region41: #{gated_attention_forward.1} parent=1 // pred_fallthru
      _
    // Predicated region
    $region42: #{gated_attention_forward.1} parent=1 // pred_check
      _
    $region43: #{gated_attention_forward.1} parent=1 // pred_check_branch
      %964 = sbr.rel (0) target = $region45
    $region44: #{gated_attention_forward.1} parent=1 // pred_region
      %965 = dma.done [#allocation9], 16
    $region45: #{gated_attention_forward.1} parent=1 // pred_fallthru
      _
    %966 = vsyncpa [#allocation3], 1
    %967 = vsyncpa [#allocation4], 1
    %968 = vsyncpa [#allocation9], 1
    %969 = vsyncpa [#allocation5], 1

</llo_original>
